<compile_context>
chip_gen: v7x
topology: tpu7x:2x2x1
jax: 0.10.0
libtpu: 0.0.40
codegen_flags: <defaults>
</compile_context>

<pallas_src>
import functools

import jax
import jax.numpy as jnp
from jax.experimental import pallas as pl
from jax.experimental.pallas import tpu as pltpu

VMEM = pltpu.MemorySpace.VMEM


# ----------------------------------------------------------------------------
# Group divider: FPS kernel + fused distance/KNN kernel (+ XLA gather glue)
# ----------------------------------------------------------------------------
def _fps_kernel(p_ref, c_ref):
    # p_ref: (1, 8, N)   c_ref: (1, 8, G)   (channels-first, N/G on lanes)
    # Deterministic farthest-point sampling (starts at point 0, matching the
    # previous reference implementation; PyTorch FPS often uses a random start).
    G = c_ref.shape[2]
    N = p_ref.shape[2]
    lane_n = jax.lax.broadcasted_iota(jnp.int32, (1, N), 1)
    lane_g = jax.lax.broadcasted_iota(jnp.int32, (1, G), 1)

    p0 = p_ref[0]                                          # (8, N)
    last0 = p0[:, 0:1]                                     # (8, 1): first center
    centers0 = jnp.where(lane_g == 0, last0, 0.0)          # (8, G)
    dmin0 = jnp.full((1, N), jnp.inf, jnp.float32)

    def body(i, carry):
        centers, lastp, dmin = carry
        p = p_ref[0]                                       # re-read from VMEM each iter
        d = jnp.sum((p - lastp) ** 2, axis=0, keepdims=True)       # (1, N)
        dmin = jnp.minimum(dmin, d)
        m = jnp.max(dmin, axis=1, keepdims=True)
        # first-argmax index via iota-min trick (no argmax lowering needed)
        nxt = jnp.min(jnp.where(dmin >= m, lane_n, jnp.int32(N)),
                      axis=1, keepdims=True)               # (1, 1) int32
        # gather selected point's coords via mask + lane reduction
        newp = jnp.sum(jnp.where(lane_n == nxt, p, 0.0),
                       axis=1, keepdims=True)              # (8, 1)
        centers = jnp.where(lane_g == i, newp, centers)
        return centers, newp, dmin

    centers, _, _ = jax.lax.fori_loop(1, G, body, (centers0, last0, dmin0))
    c_ref[0] = centers


def fps_centers(p_cf, num_group):
    # p_cf: [B, 8, N] -> centers channels-first [B, 8, G]
    B, _, N = p_cf.shape
    return pl.pallas_call(
        _fps_kernel,
        out_shape=jax.ShapeDtypeStruct((B, 8, num_group), jnp.float32),
        grid=(B,),
        in_specs=[pl.BlockSpec((1, 8, N), lambda b: (b, 0, 0))],
        out_specs=pl.BlockSpec((1, 8, num_group), lambda b: (b, 0, 0)),
        compiler_params=pltpu.CompilerParams(dimension_semantics=("parallel",)),
    )(p_cf)


def _knn_kernel(c_ref, p_ref, idx_ref):
    # c_ref: (1, Gt, 8)  p_ref: (1, 8, N)  idx_ref: (1, Gt, S) int32
    # Fused pairwise squared distance + k-nearest selection: the [Gt, N]
    # distance tile stays in VMEM/vregs (no HBM round trip, no XLA top_k).
    c = c_ref[0]                                           # (Gt, 8)
    p = p_ref[0]                                           # (8, N)
    Gt = c.shape[0]
    N = p.shape[1]
    S = idx_ref.shape[2]

    d = jnp.zeros((Gt, N), jnp.float32)
    for k in range(3):                                     # pure-VPU broadcast FMA
        diff = c[:, k:k + 1] - p[k:k + 1, :]               # (Gt,1) - (1,N) -> (Gt,N)
        d = d + diff * diff                                # non-negative by construction

    lane_n = jax.lax.broadcasted_iota(jnp.int32, (Gt, N), 1)
    lane_s = jax.lax.broadcasted_iota(jnp.int32, (1, S), 1)

    def body(j, carry):
        dist, knn = carry
        m = jnp.min(dist, axis=1, keepdims=True)                       # (Gt, 1)
        amin = jnp.min(jnp.where(dist <= m, lane_n, jnp.int32(N)),
                       axis=1, keepdims=True)                          # (Gt, 1) int32
        knn = jnp.where(lane_s == j, amin, knn)                        # (Gt, S)
        dist = jnp.where(lane_n == amin, jnp.inf, dist)
        return dist, knn

    knn0 = jnp.zeros((Gt, S), jnp.int32)
    _, knn = jax.lax.fori_loop(0, S, body, (d, knn0), unroll=True)
    idx_ref[0] = knn


def knn_indices(c8, p_cf, group_size):
    # c8: [B, G, 8] (coords on lanes; tiny), p_cf: [B, 8, N] -> [B, G, S] int32
    B, G, _ = c8.shape
    N = p_cf.shape[2]
    gt = G if G <= 128 else 128          # tile G; whole N per tile (fits VMEM for N<=8K)
    assert G % gt == 0
    return pl.pallas_call(
        _knn_kernel,
        out_shape=jax.ShapeDtypeStruct((B, G, group_size), jnp.int32),
        grid=(B, G // gt),
        in_specs=[pl.BlockSpec((1, gt, 8), lambda b, g: (b, g, 0)),
                  pl.BlockSpec((1, 8, N), lambda b, g: (b, 0, 0))],
        out_specs=pl.BlockSpec((1, gt, group_size), lambda b, g: (b, g, 0)),
        compiler_params=pltpu.CompilerParams(
            dimension_semantics=("parallel", "parallel")),
    )(c8, p_cf)


def group_divider(pts, num_group, group_size):
    # Mirrors Group(num_group, group_size): FPS centers, KNN neighborhoods,
    # neighborhoods re-centered on their center.
    p_cf = jnp.pad(jnp.transpose(pts, (0, 2, 1)), ((0, 0), (0, 5), (0, 0)))  # [B,8,N]
    centers_cf = fps_centers(p_cf, num_group)                  # [B, 8, G]  (Pallas)
    c8 = jnp.transpose(centers_cf, (0, 2, 1))                  # [B, G, 8]  (tiny)
    center = c8[:, :, :3]                                      # [B, G, 3]
    knn_idx = knn_indices(c8, p_cf, group_size)                # [B, G, S]  (Pallas)
    neighborhood = jax.vmap(lambda p, i: p[i])(pts, knn_idx)   # [B, G, S, 3] (XLA gather)
    neighborhood = neighborhood - center[:, :, None, :]
    return neighborhood, center


# ----------------------------------------------------------------------------
# mask-token fill:  encoder_token[mask] = mask_token
# ----------------------------------------------------------------------------
def _mask_fill_kernel(tok_ref, mask_ref, mtok_ref, o_ref):
    # tok_ref: (B, G, C)  mask_ref: (B, G, 1) float  mtok_ref: (1, 1, C)
    # NOTE: a lane-dense (B, G) mask would avoid per-element lane padding but
    # needs an in-kernel lane->sublane relayout; kept (B, G, 1) for robustness.
    o_ref[...] = jnp.where(mask_ref[...] > 0.5, mtok_ref[...], tok_ref[...])


def apply_mask_token(encoder_token, mask, mask_token):
    B, G, C = encoder_token.shape
    mask_f = mask.astype(jnp.float32)[..., None]               # (B, G, 1)
    return pl.pallas_call(
        _mask_fill_kernel,
        out_shape=jax.ShapeDtypeStruct((B, G, C), jnp.float32),
        in_specs=[pl.BlockSpec(memory_space=VMEM)] * 3,
        out_specs=pl.BlockSpec(memory_space=VMEM),
    )(encoder_token, mask_f, mask_token)


# ----------------------------------------------------------------------------
# Fused csc branch: img_proj / text_proj Linear + SmoothL1 (mean) in one call.
# Losses packed in a lane-dense (1, 128) output slab: [0,0]=img, [0,1]=text.
# ----------------------------------------------------------------------------
def _csc_kernel(img_feat_ref, img_tok_ref, img_w_ref, img_b_ref,
                txt_feat_ref, txt_tok_ref, txt_w_ref, txt_b_ref, o_ref,
                *, inv_n_img, inv_n_txt):
    def smooth_l1(feat, pred, inv_n):                      # torch SmoothL1, beta=1.0
        d = feat - pred
        ad = jnp.abs(d)
        return jnp.sum(jnp.where(ad < 1.0, 0.5 * d * d, ad - 0.5),
                       keepdims=True) * inv_n              # (1, 1)

    pi = jnp.dot(img_tok_ref[...].astype(jnp.bfloat16),
                 img_w_ref[...].astype(jnp.bfloat16),
                 preferred_element_type=jnp.float32) + img_b_ref[...]
    li = smooth_l1(img_feat_ref[...], pi, inv_n_img)
    pt = jnp.dot(txt_tok_ref[...].astype(jnp.bfloat16),
                 txt_w_ref[...].astype(jnp.bfloat16),
                 preferred_element_type=jnp.float32) + txt_b_ref[...]
    lt = smooth_l1(txt_feat_ref[...], pt, inv_n_txt)

    lane = jax.lax.broadcasted_iota(jnp.int32, (1, 128), 1)
    o_ref[...] = jnp.where(lane == 0, li, jnp.where(lane == 1, lt, 0.0))


def csc_losses(img_feature, img_token, img_params, text_feature, text_token, text_params):
    iw, ib = img_params
    tw, tb = text_params
    out = pl.pallas_call(
        functools.partial(_csc_kernel,
                          inv_n_img=1.0 / float(img_feature.size),
                          inv_n_txt=1.0 / float(text_feature.size)),
        out_shape=jax.ShapeDtypeStruct((1, 128), jnp.float32),
        in_specs=[pl.BlockSpec(memory_space=VMEM)] * 8,
        out_specs=pl.BlockSpec(memory_space=VMEM),
    )(img_feature, img_token, iw, ib, text_feature, text_token, tw, tb)
    return out[0, 0], out[0, 1]


# ----------------------------------------------------------------------------
# smc branch: cls_proj (Linear->BN->ReLU->Linear->BN), L2-normalize, z @ z.T
# BatchNorm1d in training mode (batch statistics, eps=1e-5), fused in one kernel.
# ----------------------------------------------------------------------------
def _cls_sim_kernel(x_ref, w1_ref, b1_ref, g1_ref, be1_ref,
                    w2_ref, b2_ref, g2_ref, be2_ref, o_ref):
    eps = 1e-5
    h = jnp.dot(x_ref[...].astype(jnp.bfloat16), w1_ref[...].astype(jnp.bfloat16),
                preferred_element_type=jnp.float32) + b1_ref[...]
    mu = jnp.mean(h, axis=0, keepdims=True)
    var = jnp.mean((h - mu) ** 2, axis=0, keepdims=True)
    h = g1_ref[...] * (h - mu) * jax.lax.rsqrt(var + eps) + be1_ref[...]
    h = jnp.maximum(h, 0.0)
    h = jnp.dot(h.astype(jnp.bfloat16), w2_ref[...].astype(jnp.bfloat16),
                preferred_element_type=jnp.float32) + b2_ref[...]
    mu2 = jnp.mean(h, axis=0, keepdims=True)
    var2 = jnp.mean((h - mu2) ** 2, axis=0, keepdims=True)
    h = g2_ref[...] * (h - mu2) * jax.lax.rsqrt(var2 + eps) + be2_ref[...]
    nrm = jnp.sqrt(jnp.sum(h * h, axis=-1, keepdims=True))    # F.normalize, dim=1
    z = h / jnp.maximum(nrm, 1e-12)
    o_ref[...] = jax.lax.dot_general(z, z, (((1,), (1,)), ((), ())),
                                     preferred_element_type=jnp.float32)


def cls_proj_similarity(cls_token, cls_params):
    B = cls_token.shape[0]
    return pl.pallas_call(
        _cls_sim_kernel,
        out_shape=jax.ShapeDtypeStruct((B, B), jnp.float32),
        in_specs=[pl.BlockSpec(memory_space=VMEM)] * 9,
        out_specs=pl.BlockSpec(memory_space=VMEM),
    )(cls_token, *cls_params)


# ----------------------------------------------------------------------------
# Parameters (deterministic init mirroring PointDif.__init__ / _init_weights)
# ----------------------------------------------------------------------------
def _proj_init(k, cin, cout):
    # _init_weights: weight ~ N(mean=0.02, std=0.01), bias = 0
    w = 0.02 + 0.01 * jax.random.normal(k, (cin, cout), jnp.float32)
    b = jnp.zeros((1, cout), jnp.float32)
    return w, b


def init_params(key, trans_dim, img_dim, text_dim):
    k = jax.random.split(key, 4)
    # mask_token: zeros + trunc_normal_(std=0.02)
    mask_token = 0.02 * jax.random.truncated_normal(
        k[0], -2.0, 2.0, (1, 1, trans_dim), jnp.float32)
    img_w, img_b = _proj_init(k[1], trans_dim, img_dim)
    txt_w, txt_b = _proj_init(k[2], trans_dim, text_dim)
    kc1, kc2 = jax.random.split(k[3])
    w1, b1 = _proj_init(kc1, trans_dim, 128)
    w2, b2 = _proj_init(kc2, 128, 128)
    g1 = jnp.ones((1, 128), jnp.float32)
    be1 = jnp.zeros((1, 128), jnp.float32)
    g2 = jnp.ones((1, 128), jnp.float32)
    be2 = jnp.zeros((1, 128), jnp.float32)
    return {
        "mask_token": mask_token,
        "img_proj": (img_w, img_b),
        "text_proj": (txt_w, txt_b),
        "cls_proj": (w1, b1, g1, be1, w2, b2, g2, be2),
    }


# ----------------------------------------------------------------------------
# Forward (mirrors PointDif.forward, vis=False path)
# ----------------------------------------------------------------------------
def point_dif_forward(params, pts, img_feature, text_feature, text_ids,
                      cls_token, img_token, text_token, encoder_token, mask,
                      num_group, group_size):
    losses = {}

    # group_divider(pts)  -- FPS + fused distance/KNN Pallas kernels
    neighborhood, center = group_divider(pts, num_group, group_size)

    # TODO(synk): Mask_Encoder is an external module (definition not in
    # PointDico.py); cls/img/text/encoder tokens and mask are deterministic
    # stand-ins supplied by the caller.

    # encoder_token[mask] = mask_token.expand(...)   (Pallas where-fill)
    encoder_token = apply_mask_token(encoder_token, mask, params["mask_token"])

    # TODO(synk): H2Net (ca_net) and CPDM (point_diffusion.get_loss) are external
    # modules with no definition available; losses['dif'] is omitted.

    # csc branches: fused (img_proj + text_proj + SmoothL1 losses) single kernel
    losses["csc_img"], losses["csc_text"] = csc_losses(
        img_feature, img_token, params["img_proj"],
        text_feature, text_token, params["text_proj"])

    # smc branch: cls_proj -> normalize -> similarity  (fused Pallas kernel)
    similarity = cls_proj_similarity(cls_token, params["cls_proj"])
    select = (text_ids[:, None] == text_ids[None, :]).astype(jnp.uint8)
    # TODO(synk): ContrastiveHead is an external module (definition not
    # available); losses['smc'] is omitted (similarity/select still produced).

    loss = sum(losses.values())
    return loss, losses, similarity, select, neighborhood, center, encoder_token


# ----------------------------------------------------------------------------
if __name__ == "__main__":
    B = 2
    N_PTS = 128
    NUM_GROUP = 16
    GROUP_SIZE = 8
    TRANS_DIM = 32
    IMG_DIM = 32
    TEXT_DIM = 32

    key = jax.random.PRNGKey(0)
    ks = jax.random.split(key, 12)

    pts = jax.random.normal(ks[0], (B, N_PTS, 3), jnp.float32)

    # Deterministic stand-ins for outputs of undefined external encoders.
    cls_token = jax.random.normal(ks[1], (B, TRANS_DIM), jnp.float32)
    img_token = jax.random.normal(ks[2], (B, TRANS_DIM), jnp.float32)
    text_token = jax.random.normal(ks[3], (B, TRANS_DIM), jnp.float32)
    encoder_token = jax.random.normal(ks[4], (B, NUM_GROUP, TRANS_DIM), jnp.float32)
    img_feature = jax.random.normal(ks[5], (B, IMG_DIM), jnp.float32)
    text_feature = jax.random.normal(ks[6], (B, TEXT_DIM), jnp.float32)
    text_ids = jnp.array([0, 0], jnp.int32)

    # Mask with a fixed number of masked groups per sample (ratio 0.5).
    n_mask = NUM_GROUP // 2
    perm = jax.vmap(lambda kk: jax.random.permutation(kk, NUM_GROUP))(
        jax.random.split(ks[7], B))
    mask = jax.vmap(lambda m, p: m.at[p[:n_mask]].set(True))(
        jnp.zeros((B, NUM_GROUP), bool), perm)

    params = init_params(ks[8], TRANS_DIM, IMG_DIM, TEXT_DIM)

    out = point_dif_forward(params, pts, img_feature, text_feature, text_ids,
                            cls_token, img_token, text_token, encoder_token,
                            mask, NUM_GROUP, GROUP_SIZE)
    jax.block_until_ready(out)

    loss, losses, similarity, select, neighborhood, center, etok = out
    assert neighborhood.shape == (B, NUM_GROUP, GROUP_SIZE, 3)
    assert center.shape == (B, NUM_GROUP, 3)
    assert etok.shape == (B, NUM_GROUP, TRANS_DIM)
    assert similarity.shape == (B, B)
    assert jnp.isfinite(loss)
    print("KERNEL_OK")
</pallas_src>

<mosaic_0001>
module attributes {stable_mosaic.version = 11 : i64} {
  func.func @_fps_kernel(%arg0: i32, %arg1: memref<1x8x128xf32, #tpu.memory_space<vmem>>, %arg2: memref<1x8x16xf32, #tpu.memory_space<vmem>>) attributes {dimension_semantics = [#tpu.dimension_semantics<parallel>], iteration_bounds = array<i64: 2>, scalar_prefetch = 0 : i64, scratch_operands = 0 : i64, tpu.core_type = #tpu.core_type<tc>, window_params = [{transform_indices = @transform_0, window_bounds = array<i64: 1, 8, 128>}, {transform_indices = @transform_1, window_bounds = array<i64: 1, 8, 16>}]} {
    %0 = tpu.iota {dimensions = array<i32: 1>} : vector<1x128xi32>
    %1 = tpu.iota {dimensions = array<i32: 1>} : vector<1x16xi32>
    %c0 = arith.constant 0 : index
    %c0_0 = arith.constant 0 : index
    %c0_1 = arith.constant 0 : index
    %2 = vector.load %arg1[%c0, %c0_0, %c0_1] : memref<1x8x128xf32, #tpu.memory_space<vmem>>, vector<1x8x128xf32>
    %3 = vector.shape_cast %2 : vector<1x8x128xf32> to vector<8x128xf32>
    %4 = vector.extract_strided_slice %3 {offsets = [0, 0], sizes = [8, 1], strides = [1, 1]} : vector<8x128xf32> to vector<8x1xf32>
    %c0_i32 = arith.constant 0 : i32
    %5 = vector.broadcast %c0_i32 : i32 to vector<1x16xi32>
    %6 = arith.cmpi eq, %1, %5 : vector<1x16xi32>
    %cst = arith.constant 0.000000e+00 : f32
    %7 = vector.shape_cast %6 : vector<1x16xi1> to vector<1x16xi1>
    %8 = vector.broadcast %7 : vector<1x16xi1> to vector<8x16xi1>
    %9 = vector.shape_cast %4 : vector<8x1xf32> to vector<8x1xf32>
    %10 = vector.broadcast %9 : vector<8x1xf32> to vector<8x16xf32>
    %11 = vector.broadcast %cst : f32 to vector<8x16xf32>
    %12 = arith.select %8, %10, %11 : vector<8x16xi1>, vector<8x16xf32>
    %cst_2 = arith.constant 0x7F800000 : f32
    %13 = vector.broadcast %cst_2 : f32 to vector<1x128xf32>
    %c1_i32 = arith.constant 1 : i32
    %c15_i32 = arith.constant 15 : i32
    %14 = arith.addi %c1_i32, %c15_i32 : i32
    %c1_i32_3 = arith.constant 1 : i32
    %15:3 = scf.for %arg3 = %c1_i32 to %14 step %c1_i32_3 iter_args(%arg4 = %12, %arg5 = %4, %arg6 = %13) -> (vector<8x16xf32>, vector<8x1xf32>, vector<1x128xf32>)  : i32 {
      %c0_8 = arith.constant 0 : index
      %c0_9 = arith.constant 0 : index
      %c0_10 = arith.constant 0 : index
      %19 = vector.load %arg1[%c0_8, %c0_9, %c0_10] : memref<1x8x128xf32, #tpu.memory_space<vmem>>, vector<1x8x128xf32>
      %20 = vector.shape_cast %19 : vector<1x8x128xf32> to vector<8x128xf32>
      %21 = vector.broadcast %arg5 : vector<8x1xf32> to vector<8x128xf32>
      %22 = arith.subf %20, %21 : vector<8x128xf32>
      %23 = arith.mulf %22, %22 : vector<8x128xf32>
      %cst_11 = arith.constant dense<0.000000e+00> : vector<128xf32>
      %24 = vector.multi_reduction <add>, %23, %cst_11 [0] : vector<8x128xf32> to vector<128xf32>
      %25 = vector.shape_cast %24 : vector<128xf32> to vector<1x128xf32>
      %26 = arith.minimumf %arg6, %25 : vector<1x128xf32>
      %cst_12 = arith.constant dense<0xFF800000> : vector<1xf32>
      %27 = vector.multi_reduction <maximumf>, %26, %cst_12 [1] : vector<1x128xf32> to vector<1xf32>
      %28 = vector.shape_cast %27 : vector<1xf32> to vector<1x1xf32>
      %29 = vector.broadcast %28 : vector<1x1xf32> to vector<1x128xf32>
      %30 = arith.cmpf oge, %26, %29 : vector<1x128xf32>
      %c128_i32 = arith.constant 128 : i32
      %31 = vector.broadcast %c128_i32 : i32 to vector<1x128xi32>
      %32 = arith.select %30, %0, %31 : vector<1x128xi1>, vector<1x128xi32>
      %cst_13 = arith.constant dense<2147483647> : vector<1xi32>
      %33 = vector.multi_reduction <minsi>, %32, %cst_13 [1] : vector<1x128xi32> to vector<1xi32>
      %34 = vector.shape_cast %33 : vector<1xi32> to vector<1x1xi32>
      %35 = vector.broadcast %34 : vector<1x1xi32> to vector<1x128xi32>
      %36 = arith.cmpi eq, %0, %35 : vector<1x128xi32>
      %cst_14 = arith.constant 0.000000e+00 : f32
      %37 = vector.shape_cast %36 : vector<1x128xi1> to vector<1x128xi1>
      %38 = vector.broadcast %37 : vector<1x128xi1> to vector<8x128xi1>
      %39 = vector.broadcast %cst_14 : f32 to vector<8x128xf32>
      %40 = arith.select %38, %20, %39 : vector<8x128xi1>, vector<8x128xf32>
      %cst_15 = arith.constant dense<0.000000e+00> : vector<8xf32>
      %41 = vector.multi_reduction <add>, %40, %cst_15 [1] : vector<8x128xf32> to vector<8xf32>
      %42 = vector.shape_cast %41 : vector<8xf32> to vector<8x1xf32>
      %43 = vector.broadcast %arg3 : i32 to vector<1x16xi32>
      %44 = arith.cmpi eq, %1, %43 : vector<1x16xi32>
      %45 = vector.shape_cast %44 : vector<1x16xi1> to vector<1x16xi1>
      %46 = vector.broadcast %45 : vector<1x16xi1> to vector<8x16xi1>
      %47 = vector.shape_cast %42 : vector<8x1xf32> to vector<8x1xf32>
      %48 = vector.broadcast %47 : vector<8x1xf32> to vector<8x16xf32>
      %49 = arith.select %46, %48, %arg4 : vector<8x16xi1>, vector<8x16xf32>
      scf.yield %49, %42, %26 : vector<8x16xf32>, vector<8x1xf32>, vector<1x128xf32>
    }
    %c15_i32_4 = arith.constant 15 : i32
    %c0_5 = arith.constant 0 : index
    %c0_6 = arith.constant 0 : index
    %c0_7 = arith.constant 0 : index
    %16 = vector.load %arg2[%c0_5, %c0_6, %c0_7] : memref<1x8x16xf32, #tpu.memory_space<vmem>>, vector<1x8x16xf32>
    %17 = vector.shape_cast %16 : vector<1x8x16xf32> to vector<8x16xf32>
    %18 = vector.shape_cast %15#0 : vector<8x16xf32> to vector<1x8x16xf32>
    tpu.vector_store %arg2[%c0_5, %c0_6, %c0_7], %18 {strides = array<i32>} : memref<1x8x16xf32, #tpu.memory_space<vmem>>, vector<1x8x16xf32>,
    return
  }
  func.func @transform_0(%arg0: i32) -> (i32, i32, i32) {
    %c0_i32 = arith.constant 0 : i32
    %c0_i32_0 = arith.constant 0 : i32
    %c0_i32_1 = arith.constant 0 : i32
    return %arg0, %c0_i32, %c0_i32_0 : i32, i32, i32
  }
  func.func @transform_1(%arg0: i32) -> (i32, i32, i32) {
    %c0_i32 = arith.constant 0 : i32
    %c0_i32_0 = arith.constant 0 : i32
    %c0_i32_1 = arith.constant 0 : i32
    return %arg0, %c0_i32, %c0_i32_0 : i32, i32, i32
  }
}

</mosaic_0001>

<llo_original>
// kernel: tpu_custom_call.1
$region0: #{tpu_custom_call.1}
  #allocation0 [shape = 'u32[]', space=smem, size = 0x4, offset = 0x4, fixed_abs, tag = 'smem constant byte address 0x4 - core index']
  #allocation1 [shape = 'u32[144,128]{1,0:T(1,128)}', space=vmem, size = 0x12000, scoped, tag = 'internal scratch']
  %s0 = inlined_call_operand.hbm [shape: f32[2,8,128], index: 0, kind: input, shape index: {}]
  %s1 = inlined_call_operand.hbm [shape: f32[2,8,16], index: 1, kind: output, shape index: {}]
  %s2 = sld [smem:[#allocation0]]
  $region48: #{tpu_custom_call.1} parent=0
    _
  %s4 = ssub.s32 1, %s2
  %s5 = scalar_select 0, %s4, %s2
  $region1: #{tpu_custom_call.1} parent=0
    #allocation2 [shape = 'u8[8192]{0}', space=vmem, size = 0x2000, scoped, tag = 'input window, operand 0']
    #allocation3 [shape = 's32[2]{0}', space=sflag, size = 0x8, scoped, tag = 'scoped memory for tpu_custom_call.1']
    #allocation4 [shape = 's32[2]{0}', space=sflag, size = 0x8, scoped, tag = 'scoped memory for tpu_custom_call.1']
    #allocation5 [shape = 'u8[8192]{0}', space=vmem, size = 0x2000, scoped, tag = 'output window, operand 0']
    %6 = vsyncpa [#allocation3], 0
    %s7 = scalar_lea.sflag [#allocation3], 1
    %8 = vsyncpa %s7, 0
    %9 = vsyncpa [#allocation4], 0
    %s10 = scalar_lea.sflag [#allocation4], 1
    %11 = vsyncpa %s10, 0
    loop: start=0, step=1, limit=4
    $region2: #{tpu_custom_call.1} parent=1 // loop_pre_header
      _
    $region3: #{tpu_custom_call.1} parent=1 // loop_header
      %s13 = sphi 0, %s17
      %p14 = scmp.ge.s32.totalorder %s13, 4
      %s23 = sphi 0, %s25
      %s26 = sphi 0, %s23
      %s27 = sphi 0, %s26
      %s43 = sphi 0, %s27
      %s49 = sphi 0, %s51
      %s52 = sphi 0, %s49
      %s53 = sphi 0, %s52
      %s69 = sphi 0, %s53
    $region4: #{tpu_custom_call.1} parent=1 // loop_header_branch
      %16 = sbr.rel (%p14) target = $region8
    $region5: #{tpu_custom_call.1} parent=1 // loop_body
      %s18 = ssub.s32 %s13, 1
      %s19 = ssub.s32 %s13, 2
      %s20 = sadd.s32 %s13, 1
      %s21 = ssub.s32 %s13, %s20
      %p22 = scmp.eq.s32.totalorder %s21, 0
      %s24 = sadd.s32 %s23, 1
      %s25 = scalar_select %p22, %s23, %s24
      %p28 = pneg %p22
      %p29 = scmp.eq.s32.totalorder %s13, 1
      %p30 = por %p28, %p29
      %p31 = scmp.ne.s32.totalorder %s23, %s26
      %p32 = scmp.eq.s32.totalorder %s13, 0
      %p33 = por %p31, %p32
      %p34 = scmp.ne.s32.totalorder %s23, %s26
      %p35 = scmp.eq.s32.totalorder %s18, 1
      %p36 = por %p34, %p35
      %p37 = scmp.ne.s32.totalorder %s26, %s27
      %p38 = scmp.eq.s32.totalorder %s18, 0
      %p39 = por %p37, %p38
      %p40 = scmp.ne.s32.totalorder %s26, %s27
      %p41 = scmp.eq.s32.totalorder %s19, 1
      %p42 = por %p40, %p41
      %p44 = scmp.ne.s32.totalorder %s27, %s43
      %p45 = scmp.eq.s32.totalorder %s19, 0
      %p46 = por %p44, %p45
      %s47 = ssub.s32 %s13, %s20
      %p48 = scmp.eq.s32.totalorder %s47, 0
      %s50 = sadd.s32 %s49, 1
      %s51 = scalar_select %p48, %s49, %s50
      %p54 = pneg %p48
      %p55 = scmp.eq.s32.totalorder %s13, 1
      %p56 = por %p54, %p55
      %p57 = scmp.ne.s32.totalorder %s49, %s52
      %p58 = scmp.eq.s32.totalorder %s13, 0
      %p59 = por %p57, %p58
      %p60 = scmp.ne.s32.totalorder %s49, %s52
      %p61 = scmp.eq.s32.totalorder %s18, 1
      %p62 = por %p60, %p61
      %p63 = scmp.ne.s32.totalorder %s52, %s53
      %p64 = scmp.eq.s32.totalorder %s18, 0
      %p65 = por %p63, %p64
      %p66 = scmp.ne.s32.totalorder %s52, %s53
      %p67 = scmp.eq.s32.totalorder %s19, 1
      %p68 = por %p66, %p67
      %p70 = scmp.ne.s32.totalorder %s53, %s69
      %p71 = scmp.eq.s32.totalorder %s19, 0
      %p72 = por %p70, %p71
      %p73 = scmp.le.s32.totalorder 1, %s13
      %p74 = scmp.lt.s32.totalorder %s13, 3
      %p75 = pnand %p73, %p74
      %p76 = pneg %p75
      // Predicated region
      $region9: #{tpu_custom_call.1} parent=5 // pred_check
        _
      $region10: #{tpu_custom_call.1} parent=5 // pred_check_branch
        %78 = sbr.rel (%p75) target = $region12
      $region11: #{tpu_custom_call.1} parent=5 // pred_region
        %s79 = ssub.s32 %s13, 1
      $region12: #{tpu_custom_call.1} parent=5 // pred_fallthru
        _
      %p80 = scmp.lt.s32.totalorder %s13, 2
      // Predicated region
      $region13: #{tpu_custom_call.1} parent=5 // pred_check
        %p81 = pneg %p80
      $region14: #{tpu_custom_call.1} parent=5 // pred_check_branch
        %83 = sbr.rel (%p81) target = $region16
      $region15: #{tpu_custom_call.1} parent=5 // pred_region
        // Predicated region
        $region17: #{tpu_custom_call.1} parent=15 // pred_check
          %p84 = pneg %p33
        $region18: #{tpu_custom_call.1} parent=15 // pred_check_branch
          %86 = sbr.rel (%p84) target = $region20
        $region19: #{tpu_custom_call.1} parent=15 // pred_region
          %s87 = sand.u32 %s23, 1
          %s88 = scalar_lea.sflag [#allocation3], %s87
          %s89 = sand.u32 %s23, 1
          %s90 = smul.addr %s89, 8
          %s91 = scalar_lea.vmem [#allocation2], %s90
          %s93 = ssub.s32 128, 128
          %94 = vsyncadd %s88, %s93
          %s95 = smul.addr %s13, 128
          %s96 = scalar_lea.hbm %s0, %s95
          %s98 = sshll.u32 %s91, 4
          %s99 = int_to_ptr.vmem [resolvable:$true] %s98
          %101 = dma.hbm_to_vmem [thread:$0]  %s96, 128, %s99, %s88
        $region20: #{tpu_custom_call.1} parent=15 // pred_fallthru
          _
      $region16: #{tpu_custom_call.1} parent=5 // pred_fallthru
        _
      %p102 = scmp.le.s32.totalorder 1, %s13
      %p103 = scmp.lt.s32.totalorder %s13, 3
      %p104 = pnand %p102, %p103
      %p105 = pneg %p104
      // Predicated region
      $region21: #{tpu_custom_call.1} parent=5 // pred_check
        _
      $region22: #{tpu_custom_call.1} parent=5 // pred_check_branch
        %107 = sbr.rel (%p104) target = $region24
      $region23: #{tpu_custom_call.1} parent=5 // pred_region
        %s108 = ssub.s32 %s13, 1
        %s109 = sand.u32 %s26, 1
        %s110 = scalar_lea.sflag [#allocation3], %s109
        %s111 = sand.u32 %s26, 1
        %s112 = smul.addr %s111, 8
        %s113 = scalar_lea.vmem [#allocation2], %s112
        // Predicated region
        $region25: #{tpu_custom_call.1} parent=23 // pred_check
          %p114 = pneg %p39
        $region26: #{tpu_custom_call.1} parent=23 // pred_check_branch
          %116 = sbr.rel (%p114) target = $region28
        $region27: #{tpu_custom_call.1} parent=23 // pred_region
          %117 = dma.done %s110, 128
        $region28: #{tpu_custom_call.1} parent=23 // pred_fallthru
          _
        %s118 = sand.u32 %s26, 1
        %s119 = scalar_lea.sflag [#allocation3], %s118
        %s120 = sand.u32 %s26, 1
        %s121 = smul.addr %s120, 8
        %s122 = scalar_lea.vmem [#allocation2], %s121
        %p123 = pneg %p39
        %p124 = pneg %p36
        %p125 = pneg %p65
        %p126 = pneg %p62
        %s127 = sand.u32 %s52, 1
        %s128 = scalar_lea.sflag [#allocation4], %s127
        %s129 = sand.u32 %s52, 1
        %s130 = smul.addr %s129, 8
        %s131 = scalar_lea.vmem [#allocation5], %s130
        %v132 = vlaneseq
        %v133 = vand.u32 %v132, 127
        %v134 = vld [vmem:[%s113] sm:$0xff]
        %vm135 = vcmp.eq.s32.totalorder %v133, 0
        %v136 = vsel %vm135, 1, 0
        %vm137 = vcmp.eq.s32.totalorder %v136, 1
        %139 = vset.pattern.permute.xlu0 0
        %140 = vperm.xlu0 %139, %v134
        %v141 = vpop.permute.xlu0 %140
        %v143 = vsel %vm137, %v141, 0.0
        loop: start=1, step=1, limit=16
        $region29: #{tpu_custom_call.1} parent=23 // loop_pre_header
          _
        $region30: #{tpu_custom_call.1} parent=23 // loop_header
          %s145 = sphi 1, %s149
          %p146 = scmp.ge.s32.totalorder %s145, 16
          %v150 = vphi %v143, %v196
          %v151 = vphi %v134, %v191
          %v152 = vphi inf, %v167
        $region31: #{tpu_custom_call.1} parent=23 // loop_header_branch
          %148 = sbr.rel (%p146) target = $region35
        $region32: #{tpu_custom_call.1} parent=23 // loop_body
          %v153 = vld [vmem:[%s113] sm:$0xff]
          %155 = vset.pattern.permute.xlu0 0
          %156 = vperm.xlu0 %155, %v151
          %v157 = vpop.permute.xlu0 %156
          %v159 = vsub.f32 %v153, %v157
          %v160 = vmul.f32 %v159, %v159
          %v161 = vrot.slane %v160, 4
          %v162 = vadd.f32 %v160, %v161
          %v163 = vrot.slane %v162, 2
          %v164 = vadd.f32 %v162, %v163
          %v165 = vrot.slane %v164, 1
          %v166 = vadd.f32 %v164, %v165
          %v167 = vmin.f32 %v152, %v166
          %168 = vmax.xlane.f32.xlu0 %v167
          %v169 = vpop.xlane.xlu0 %168
          %vm170 = vcmp.ge.f32.partialorder %v167, %v169
          %v171 = vsel %vm170, %v133, 128
          %v172 = vand.u32 %v171, 65535
          %v173 = vshra.s32 %v171, 16
          %v174 = vcvt.s32.f32 %v172
          %v175 = vcvt.s32.f32 %v173
          %176 = vmin.xlane.f32.xlu0 %v175
          %v177 = vpop.xlane.xlu0 %176
          %vm178 = vcmp.eq.f32.partialorder %v175, %v177
          %v179 = vsel %vm178, %v174, inf
          %180 = vmin.xlane.f32.xlu0 %v179
          %v181 = vpop.xlane.xlu0 %180
          %v182 = vcvt.f32.s32 %v181
          %v183 = vcvt.f32.s32 %v177
          %v184 = vshll.u32 %v183, 16
          %v185 = vadd.s32 %v184, %v182
          %vm186 = vcmp.eq.s32.totalorder %v133, %v185
          %v187 = vsel %vm186, 1, 0
          %vm188 = vcmp.eq.s32.totalorder %v187, 1
          %v189 = vsel %vm188, %v153, 0.0
          %190 = vadd.xlane.f32.xlu0 %v189
          %v191 = vpop.xlane.xlu0 %190
          %v192 = vstv %s145
          %vm193 = vcmp.eq.s32.totalorder %v133, %v192
          %v194 = vsel %vm193, 1, 0
          %vm195 = vcmp.eq.s32.totalorder %v194, 1
          %v196 = vsel %vm195, %v191, %v150
        $region33: #{tpu_custom_call.1} parent=23 // loop_footer
          %s149 = sadd.s32 1, %s145
        $region34: #{tpu_custom_call.1} parent=23 // loop_footer_branch
          %144 = sbr.rel target = $region30
        $region35: #{tpu_custom_call.1} parent=23 // loop_exit
          _
        %vm197 = vcmask 130048
        %198 = vst.msk [vmem:[%s131] sm:$0xff] %vm197, %v150
        %s199 = sand.u32 %s52, 1
        %s200 = scalar_lea.sflag [#allocation4], %s199
        %s201 = sand.u32 %s52, 1
        %s202 = smul.addr %s201, 8
        %s203 = scalar_lea.vmem [#allocation5], %s202
        // Predicated region
        $region36: #{tpu_custom_call.1} parent=23 // pred_check
          %p204 = pneg %p62
        $region37: #{tpu_custom_call.1} parent=23 // pred_check_branch
          %206 = sbr.rel (%p204) target = $region39
        $region38: #{tpu_custom_call.1} parent=23 // pred_region
          %s208 = ssub.s32 128, 128
          %209 = vsyncadd %s200, %s208
          %s210 = smul.addr %s18, 128
          %s211 = scalar_lea.hbm %s1, %s210
          %s213 = sshll.u32 %s203, 4
          %s214 = int_to_ptr.vmem [resolvable:$true] %s213
          %216 = dma.vmem_to_hbm [thread:$0]  %s214, 128, %s211, %s200
        $region39: #{tpu_custom_call.1} parent=23 // pred_fallthru
          _
      $region24: #{tpu_custom_call.1} parent=5 // pred_fallthru
        _
      %p217 = scmp.le.s32.totalorder 2, %s13
      // Predicated region
      $region40: #{tpu_custom_call.1} parent=5 // pred_check
        %p218 = pneg %p217
      $region41: #{tpu_custom_call.1} parent=5 // pred_check_branch
        %220 = sbr.rel (%p218) target = $region43
      $region42: #{tpu_custom_call.1} parent=5 // pred_region
        %s221 = ssub.s32 %s13, 2
        // Predicated region
        $region44: #{tpu_custom_call.1} parent=42 // pred_check
          %p222 = pneg %p68
        $region45: #{tpu_custom_call.1} parent=42 // pred_check_branch
          %224 = sbr.rel (%p222) target = $region47
        $region46: #{tpu_custom_call.1} parent=42 // pred_region
          %s225 = sand.u32 %s53, 1
          %s226 = scalar_lea.sflag [#allocation4], %s225
          %s227 = sand.u32 %s53, 1
          %s228 = smul.addr %s227, 8
          %s229 = scalar_lea.vmem [#allocation5], %s228
          %230 = dma.done %s226, 128
        $region47: #{tpu_custom_call.1} parent=42 // pred_fallthru
          _
      $region43: #{tpu_custom_call.1} parent=5 // pred_fallthru
        _
    $region6: #{tpu_custom_call.1} parent=1 // loop_footer
      %s17 = sadd.s32 1, %s13
    $region7: #{tpu_custom_call.1} parent=1 // loop_footer_branch
      %12 = sbr.rel target = $region3
    $region8: #{tpu_custom_call.1} parent=1 // loop_exit
      _
    %231 = vsyncpa [#allocation3], 1
    %s232 = scalar_lea.sflag [#allocation3], 1
    %233 = vsyncpa %s232, 1
    %234 = vsyncpa [#allocation4], 1
    %s235 = scalar_lea.sflag [#allocation4], 1
    %236 = vsyncpa %s235, 1

</llo_original>
